<compile_context>
chip_gen: v7x
topology: tpu7x:2x2x1
jax: 0.10.0
libtpu: 0.0.40
codegen_flags: <defaults>
</compile_context>

<pallas_src>
import functools
import math

import jax
import jax.numpy as jnp
from jax.experimental import pallas as pl
from jax.experimental.pallas import tpu as pltpu

LANE = 128  # TPU lane width; feature dims are padded to this.


def _round_up(n, m):
    return ((n + m - 1) // m) * m


def _cdiv(a, b):
    return -(-a // b)


def _r1(D):
    # Layer-1 x-row block height in the weight slab. 32 keeps every later
    # 128-row block sublane-pack aligned for f32 (8), bf16 (16) and int8/fp8 (32).
    return _round_up(D, 32)


# -----------------------------------------------------------------------------
# One-time parameter packing (not on the per-call hot path).
# -----------------------------------------------------------------------------
def pack_params(params, D, w_dtype=jnp.bfloat16):
    """Pack MLP params into two contiguous lane-padded slabs.

    Returns:
      w_slab: w_dtype[R1 + 128*(L-1), 128]  (layer-1 x-rows, then 128-row blocks)
      b_slab: f32[L+1, 128]   (row 0 = W1[D, :] t-column; rows 1..L = biases; f32
                               so the VPU epilogue math stays f32 on v5e too)
    """
    R1 = _r1(D)

    w1, b1 = params[0]
    in1, out1 = w1.shape
    assert in1 == D + 1, "layer-1 input must be D+1 (x concat c_noise)"
    assert out1 <= LANE  # TODO(synk): tile the lane dim if hidden width > 128.
    w1 = w1.astype(jnp.float32)

    w_pieces = [jnp.pad(w1[:D, :], ((0, R1 - D), (0, LANE - out1)))]
    b_rows = [
        jnp.pad(w1[D, :], (0, LANE - out1)),                       # t-column of W1
        jnp.pad(b1.astype(jnp.float32), (0, LANE - out1)),         # b1
    ]
    for (w, b) in params[1:]:
        in_i, out_i = w.shape
        assert in_i <= LANE and out_i <= LANE  # TODO(synk): tile if widths > 128.
        w_pieces.append(
            jnp.pad(w.astype(jnp.float32), ((0, LANE - in_i), (0, LANE - out_i))))
        b_rows.append(jnp.pad(b.astype(jnp.float32), (0, LANE - out_i)))

    w_slab = jnp.concatenate(w_pieces, axis=0).astype(w_dtype)  # [R1+128*(L-1),128]
    b_slab = jnp.stack(b_rows, axis=0)                          # [L+1, 128] f32
    return w_slab, b_slab


# -----------------------------------------------------------------------------
# Batch tiling: big tiles (amortize ~0.35us/step + DMA setup), ragged B padded,
# >=2 steps for large B so v7x megacore gets both TensorCores.
# -----------------------------------------------------------------------------
def _choose_tiling(B, D, x_itemsize):
    Bp = _round_up(max(B, 1), 8)
    # Conservative VMEM budget for the double-buffered x + f32 out tiles: 8 MiB
    # fits every generation's *default* scoped-VMEM limit (v5e 16 MiB) with room
    # for the weight/bias slabs, so no vmem_limit_bytes override is needed.
    bytes_per_row = D * (x_itemsize + 4)
    vmem_rows = (8 * 1024 * 1024) // (2 * max(bytes_per_row, 1))
    max_block = max(8, min(8192, (vmem_rows // 8) * 8))

    if Bp <= min(1024, max_block):
        # Small batch: single grid step; megacore split not worth the overhead.
        return Bp, Bp, 1

    nb = max(2, _cdiv(Bp, max_block))          # >=2 steps => v7x uses both TCs
    block_b = _round_up(_cdiv(Bp, nb), 8)
    return block_b, nb * block_b, nb


# -----------------------------------------------------------------------------
# Pallas kernel: c_noise + full MLP forward + VE preconditioning residual.
# -----------------------------------------------------------------------------
def _make_kernel(num_layers, D, R1, mm_dtype):
    def kernel(sigma_ref, x_ref, w_ref, b_ref, out_ref):
        sigma = sigma_ref[0]                   # scalar from SMEM (= c_out)
        x_in = x_ref[...]                      # [block_b, D] native dtype
        x32 = x_in.astype(jnp.float32)         # f32 copy for the residual add
        bias = b_ref[...]                      # [L+1, 128] f32 (row 0 = t-col of W1)

        # c_noise = log(0.5 * sigma) as a lane vector (EUP log).
        c_noise = jnp.log(0.5 * jnp.full((1, LANE), sigma, jnp.float32))   # [1,128]

        # Layer 1 with the t-column folded into the bias:
        #   y = x @ W1[:D] + (b1 + c_noise * W1[D]).
        # Dot operands in mm_dtype (bf16 by default), accumulation + epilogue f32.
        b_eff = bias[1:2, :] + c_noise * bias[0:1, :]
        y = jnp.dot(x_in.astype(mm_dtype), w_ref[0:D, :],
                    preferred_element_type=jnp.float32) + b_eff
        y = jnp.maximum(y, 0.0)                # act after every layer (matches ref)

        row = R1
        for i in range(1, num_layers):
            y = jnp.dot(y.astype(mm_dtype), w_ref[row:row + LANE, :],
                        preferred_element_type=jnp.float32) + bias[i + 1:i + 2, :]
            y = jnp.maximum(y, 0.0)
            row += LANE

        # D_x = x + c_out * F_x   (F_x lives in the first D lanes; rest are zero)
        out_ref[...] = x32 + sigma * y[:, :D]

    return kernel


# -----------------------------------------------------------------------------
# Wrapper: single pallas_call; only sigma + x + two packed slabs cross the boundary.
# -----------------------------------------------------------------------------
@functools.partial(jax.jit, static_argnames=("num_layers",))
def veprecond_forward(x, sigma, w_slab, b_slab, *, num_layers):
    B, D = x.shape
    R1 = _r1(D)
    sigma_arr = jnp.asarray(sigma, jnp.float32).reshape((1,))

    block_b, B_pad, nb = _choose_tiling(B, D, x.dtype.itemsize)
    xp = x if B_pad == B else jnp.pad(x, ((0, B_pad - B), (0, 0)))

    smem = pl.BlockSpec(memory_space=pltpu.MemorySpace.SMEM)
    vmem = pl.BlockSpec(memory_space=pltpu.MemorySpace.VMEM)

    out = pl.pallas_call(
        _make_kernel(num_layers, D, R1, w_slab.dtype),
        out_shape=jax.ShapeDtypeStruct((B_pad, D), jnp.float32),
        grid=(nb,),
        in_specs=[
            smem,                                              # sigma scalar
            pl.BlockSpec((block_b, D), lambda i: (i, 0)),      # x batch tile
            vmem,                                              # packed weight slab
            vmem,                                              # packed bias/t-col slab
        ],
        out_specs=pl.BlockSpec((block_b, D), lambda i: (i, 0)),
        compiler_params=pltpu.CompilerParams(
            dimension_semantics=("parallel",)),
    )(sigma_arr, xp, w_slab, b_slab)

    return out if B_pad == B else out[:B]


# -----------------------------------------------------------------------------
# Deterministic parameter init (mimics torch.nn.Linear default init).
# -----------------------------------------------------------------------------
def init_params(key, layer_dims):
    params = []
    for in_ch, out_ch in zip(layer_dims, layer_dims[1:]):
        key, kw, kb = jax.random.split(key, 3)
        bound = 1.0 / math.sqrt(in_ch)
        w = jax.random.uniform(kw, (in_ch, out_ch), jnp.float32, -bound, bound)
        b = jax.random.uniform(kb, (out_ch,), jnp.float32, -bound, bound)
        params.append((w, b))
    return params


# -----------------------------------------------------------------------------
# Pure-JAX reference (original, unfolded formulation) for a sanity check.
# -----------------------------------------------------------------------------
def veprecond_ref(x, sigma, params):
    x = x.astype(jnp.float32)
    sigma = jnp.asarray(sigma, jnp.float32)
    B = x.shape[0]
    c_noise = jnp.log(0.5 * sigma)
    t = jnp.ones((B,), jnp.float32) * c_noise
    y = jnp.concatenate([x, t[:, None]], axis=-1)
    for (w, b) in params:
        y = jnp.maximum(y @ w + b, 0.0)
    return x + sigma * y


if __name__ == "__main__":
    # Small config consistent with the module: x: [B, D]; layers = [D+1, H, H, D].
    B, D, H = 8, 16, 32
    layer_dims = [D + 1, H, H, D]

    key = jax.random.PRNGKey(0)
    k_x, k_p, k_x2 = jax.random.split(key, 3)

    x = jax.random.normal(k_x, (B, D), jnp.float32)
    sigma = jnp.asarray(3.7, jnp.float32)          # 0-d scalar sigma

    params = init_params(k_p, layer_dims)
    L = len(params)

    # --- Check 1: f32 weights, f32 x (bit-level check against the reference). ---
    w32, b32 = pack_params(params, D, w_dtype=jnp.float32)
    out = jax.block_until_ready(veprecond_forward(x, sigma, w32, b32, num_layers=L))
    ref = veprecond_ref(x, sigma, params)
    assert out.shape == (B, D)
    diff = float(jnp.max(jnp.abs(out - ref)))
    assert jnp.allclose(out, ref, atol=1e-4, rtol=1e-4), diff

    # --- Check 2: bf16 weights (default fast path), f32 x; f32 accumulation. ---
    wbf, bbf = pack_params(params, D, w_dtype=jnp.bfloat16)
    out_bf = jax.block_until_ready(veprecond_forward(x, sigma, wbf, bbf, num_layers=L))
    diff_bf = float(jnp.max(jnp.abs(out_bf - ref)))
    assert jnp.allclose(out_bf, ref, atol=1e-1, rtol=5e-2), diff_bf

    # --- Check 3: ragged batch + native bf16 x (no wrapper cast, padded tile). ---
    B2 = 300
    x2 = jax.random.normal(k_x2, (B2, D), jnp.float32)
    out2 = jax.block_until_ready(
        veprecond_forward(x2.astype(jnp.bfloat16), sigma, wbf, bbf, num_layers=L))
    ref2 = veprecond_ref(x2, sigma, params)
    assert out2.shape == (B2, D)
    diff2 = float(jnp.max(jnp.abs(out2 - ref2)))
    assert jnp.allclose(out2, ref2, atol=2e-1, rtol=1e-1), diff2

    print("KERNEL_OK")
</pallas_src>

<mosaic_0001>
module attributes {stable_mosaic.version = 11 : i64} {
  func.func @kernel(%arg0: i32, %arg1: memref<1xf32, #tpu.memory_space<smem>>, %arg2: memref<8x16xf32, #tpu.memory_space<vmem>>, %arg3: memref<288x128xf32, #tpu.memory_space<vmem>>, %arg4: memref<4x128xf32, #tpu.memory_space<vmem>>, %arg5: memref<8x16xf32, #tpu.memory_space<vmem>>) attributes {dimension_semantics = [#tpu.dimension_semantics<parallel>], iteration_bounds = array<i64: 1>, scalar_prefetch = 0 : i64, scratch_operands = 0 : i64, tpu.core_type = #tpu.core_type<tc>, window_params = [{transform_indices = @transform_0, window_bounds = array<i64: 1>}, {transform_indices = @transform_1, window_bounds = array<i64: 8, 16>}, {pipeline_mode = #tpu.pipeline_mode<synchronous>, transform_indices = @transform_2, window_bounds = array<i64: 288, 128>}, {pipeline_mode = #tpu.pipeline_mode<synchronous>, transform_indices = @transform_3, window_bounds = array<i64: 4, 128>}, {transform_indices = @transform_4, window_bounds = array<i64: 8, 16>}]} {
    %c0 = arith.constant 0 : index
    %0 = memref.load %arg1[%c0] : memref<1xf32, #tpu.memory_space<smem>>
    %c0_0 = arith.constant 0 : index
    %c0_1 = arith.constant 0 : index
    %1 = vector.load %arg2[%c0_0, %c0_1] : memref<8x16xf32, #tpu.memory_space<vmem>>, vector<8x16xf32>
    %c0_2 = arith.constant 0 : index
    %c0_3 = arith.constant 0 : index
    %2 = vector.load %arg4[%c0_2, %c0_3] : memref<4x128xf32, #tpu.memory_space<vmem>>, vector<4x128xf32>
    %3 = vector.broadcast %0 : f32 to vector<1x128xf32>
    %cst = arith.constant 5.000000e-01 : f32
    %4 = vector.broadcast %cst : f32 to vector<1x128xf32>
    %5 = arith.mulf %4, %3 : vector<1x128xf32>
    %6 = math.log %5 : vector<1x128xf32>
    %7 = vector.extract_strided_slice %2 {offsets = [1, 0], sizes = [1, 128], strides = [1, 1]} : vector<4x128xf32> to vector<1x128xf32>
    %8 = vector.extract_strided_slice %2 {offsets = [0, 0], sizes = [1, 128], strides = [1, 1]} : vector<4x128xf32> to vector<1x128xf32>
    %9 = arith.mulf %6, %8 : vector<1x128xf32>
    %10 = arith.addf %7, %9 : vector<1x128xf32>
    %c0_4 = arith.constant 0 : index
    %c0_5 = arith.constant 0 : index
    %11 = vector.load %arg3[%c0_4, %c0_5] : memref<288x128xf32, #tpu.memory_space<vmem>>, vector<16x128xf32>
    %cst_6 = arith.constant dense<0.000000e+00> : vector<8x128xf32>
    %12 = tpu.matmul %1, %11, %cst_6 {dimension_numbers = #tpu.dot_dimension_numbers<[1], [0], [0], [1], [0, 0, 1, 1], [], []>} : vector<8x16xf32>, vector<16x128xf32>, vector<8x128xf32> -> vector<8x128xf32>
    %13 = vector.broadcast %10 : vector<1x128xf32> to vector<8x128xf32>
    %14 = arith.addf %12, %13 : vector<8x128xf32>
    %cst_7 = arith.constant 0.000000e+00 : f32
    %15 = vector.broadcast %cst_7 : f32 to vector<8x128xf32>
    %16 = arith.maximumf %14, %15 : vector<8x128xf32>
    %c32 = arith.constant 32 : index
    %c0_8 = arith.constant 0 : index
    %17 = vector.load %arg3[%c32, %c0_8] : memref<288x128xf32, #tpu.memory_space<vmem>>, vector<128x128xf32>
    %cst_9 = arith.constant dense<0.000000e+00> : vector<8x128xf32>
    %18 = tpu.matmul %16, %17, %cst_9 {dimension_numbers = #tpu.dot_dimension_numbers<[1], [0], [0], [1], [0, 0, 1, 1], [], []>} : vector<8x128xf32>, vector<128x128xf32>, vector<8x128xf32> -> vector<8x128xf32>
    %19 = vector.extract_strided_slice %2 {offsets = [2, 0], sizes = [1, 128], strides = [1, 1]} : vector<4x128xf32> to vector<1x128xf32>
    %20 = vector.broadcast %19 : vector<1x128xf32> to vector<8x128xf32>
    %21 = arith.addf %18, %20 : vector<8x128xf32>
    %cst_10 = arith.constant 0.000000e+00 : f32
    %22 = vector.broadcast %cst_10 : f32 to vector<8x128xf32>
    %23 = arith.maximumf %21, %22 : vector<8x128xf32>
    %c160 = arith.constant 160 : index
    %c0_11 = arith.constant 0 : index
    %24 = vector.load %arg3[%c160, %c0_11] : memref<288x128xf32, #tpu.memory_space<vmem>>, vector<128x128xf32>
    %cst_12 = arith.constant dense<0.000000e+00> : vector<8x128xf32>
    %25 = tpu.matmul %23, %24, %cst_12 {dimension_numbers = #tpu.dot_dimension_numbers<[1], [0], [0], [1], [0, 0, 1, 1], [], []>} : vector<8x128xf32>, vector<128x128xf32>, vector<8x128xf32> -> vector<8x128xf32>
    %26 = vector.extract_strided_slice %2 {offsets = [3, 0], sizes = [1, 128], strides = [1, 1]} : vector<4x128xf32> to vector<1x128xf32>
    %27 = vector.broadcast %26 : vector<1x128xf32> to vector<8x128xf32>
    %28 = arith.addf %25, %27 : vector<8x128xf32>
    %cst_13 = arith.constant 0.000000e+00 : f32
    %29 = vector.broadcast %cst_13 : f32 to vector<8x128xf32>
    %30 = arith.maximumf %28, %29 : vector<8x128xf32>
    %31 = vector.extract_strided_slice %30 {offsets = [0, 0], sizes = [8, 16], strides = [1, 1]} : vector<8x128xf32> to vector<8x16xf32>
    %32 = vector.broadcast %0 : f32 to vector<8x16xf32>
    %33 = arith.mulf %32, %31 : vector<8x16xf32>
    %34 = arith.addf %1, %33 : vector<8x16xf32>
    %c0_14 = arith.constant 0 : index
    %c0_15 = arith.constant 0 : index
    %35 = vector.load %arg5[%c0_14, %c0_15] : memref<8x16xf32, #tpu.memory_space<vmem>>, vector<8x16xf32>
    tpu.vector_store %arg5[%c0_14, %c0_15], %34 {strides = array<i32>} : memref<8x16xf32, #tpu.memory_space<vmem>>, vector<8x16xf32>,
    return
  }
  func.func @transform_0(%arg0: i32) -> i32 {
    %c0_i32 = arith.constant 0 : i32
    %c0_i32_0 = arith.constant 0 : i32
    return %c0_i32 : i32
  }
  func.func @transform_1(%arg0: i32) -> (i32, i32) {
    %c0_i32 = arith.constant 0 : i32
    %c0_i32_0 = arith.constant 0 : i32
    return %arg0, %c0_i32 : i32, i32
  }
  func.func @transform_2(%arg0: i32) -> (i32, i32) {
    %c0_i32 = arith.constant 0 : i32
    %c0_i32_0 = arith.constant 0 : i32
    %c0_i32_1 = arith.constant 0 : i32
    return %c0_i32, %c0_i32_0 : i32, i32
  }
  func.func @transform_3(%arg0: i32) -> (i32, i32) {
    %c0_i32 = arith.constant 0 : i32
    %c0_i32_0 = arith.constant 0 : i32
    %c0_i32_1 = arith.constant 0 : i32
    return %c0_i32, %c0_i32_0 : i32, i32
  }
  func.func @transform_4(%arg0: i32) -> (i32, i32) {
    %c0_i32 = arith.constant 0 : i32
    %c0_i32_0 = arith.constant 0 : i32
    return %arg0, %c0_i32 : i32, i32
  }
}

</mosaic_0001>

<llo_original>
// kernel: veprecond_forward.1
$region0: #{veprecond_forward.1}
  #allocation0 [shape = 'u32[]', space=smem, size = 0x4, offset = 0x4, fixed_abs, tag = 'smem constant byte address 0x4 - core index']
  #allocation1 [shape = 'u32[144,128]{1,0:T(1,128)}', space=vmem, size = 0x12000, scoped, tag = 'internal scratch']
  #allocation2 [shape = 'f32[1]{0:T(128)S(6)}', space=smem, size = 0x200, scoped, tag = 'scoped memory for veprecond_forward.1']
  %s0 = inlined_call_operand.<no memory space> [shape: f32[1], index: 0, kind: input, shape index: {}]
  %s1 = inlined_call_operand.hbm [shape: f32[8,16], index: 1, kind: input, shape index: {}]
  %s2 = inlined_call_operand.hbm [shape: f32[288,128], index: 2, kind: input, shape index: {}]
  %s3 = inlined_call_operand.vmem [shape: f32[4,128], index: 3, kind: input, shape index: {}]
  %s4 = inlined_call_operand.hbm [shape: f32[8,16], index: 4, kind: output, shape index: {}]
  %s5 = sld [smem:[#allocation0]]
  $region34: #{veprecond_forward.1} parent=0
    _
  %s7 = ssub.s32 1, %s5
  %s8 = scalar_select 0, %s7, %s5
  %9 = sst [smem:[#allocation2]] %s0
  $region1: #{veprecond_forward.1} parent=0
    #allocation3 [shape = 'u8[4096]{0}', space=vmem, size = 0x1000, scoped, tag = 'input window, operand 1, single buffered']
    #allocation4 [shape = 's32[1]{0}', space=sflag, size = 0x4, scoped, tag = 'scoped memory for veprecond_forward.1']
    #allocation5 [shape = 's32[1]{0}', space=sflag, size = 0x4, scoped, tag = 'scoped memory for veprecond_forward.1']
    #allocation6 [shape = 'u8[147456]{0}', space=vmem, size = 0x24000, scoped, tag = 'input window, operand 2, single buffered']
    #allocation7 [shape = 's32[1]{0}', space=sflag, size = 0x4, scoped, tag = 'scoped memory for veprecond_forward.1']
    #allocation8 [shape = 'u8[4096]{0}', space=vmem, size = 0x1000, scoped, tag = 'output window, operand 0, single buffered']
    %10 = vsyncpa [#allocation4], 0
    %11 = vsyncpa [#allocation7], 0
    %12 = vsyncpa [#allocation5], 0
    // Predicated region
    $region2: #{veprecond_forward.1} parent=1 // pred_check
      _
    $region3: #{veprecond_forward.1} parent=1 // pred_check_branch
      %14 = sbr.rel (0) target = $region5
    $region4: #{veprecond_forward.1} parent=1 // pred_region
      _
    $region5: #{veprecond_forward.1} parent=1 // pred_fallthru
      _
    // Predicated region
    $region6: #{veprecond_forward.1} parent=1 // pred_check
      _
    $region7: #{veprecond_forward.1} parent=1 // pred_check_branch
      %16 = sbr.rel (0) target = $region9
    $region8: #{veprecond_forward.1} parent=1 // pred_region
      %s18 = ssub.s32 128, 128
      %19 = vsyncadd [#allocation4], %s18
      %s21 = sshll.u32 [#allocation3], 4
      %s22 = int_to_ptr.vmem [resolvable:$true] %s21
      %24 = dma.hbm_to_vmem [thread:$0]  %s1, 128, %s22, [#allocation4]
    $region9: #{veprecond_forward.1} parent=1 // pred_fallthru
      _
    // Predicated region
    $region10: #{veprecond_forward.1} parent=1 // pred_check
      _
    $region11: #{veprecond_forward.1} parent=1 // pred_check_branch
      %26 = sbr.rel (0) target = $region13
    $region12: #{veprecond_forward.1} parent=1 // pred_region
      %s28 = ssub.s32 4608, 4608
      %29 = vsyncadd [#allocation7], %s28
      %s30 = sshll.u32 [#allocation6], 4
      %s31 = int_to_ptr.vmem [resolvable:$true] %s30
      %36 = dma.hbm_to_vmem [thread:$0]  %s2, 4608, %s31, [#allocation7], 128, 128, 8
    $region13: #{veprecond_forward.1} parent=1 // pred_fallthru
      _
    // Predicated region
    $region14: #{veprecond_forward.1} parent=1 // pred_check
      _
    $region15: #{veprecond_forward.1} parent=1 // pred_check_branch
      %38 = sbr.rel (0) target = $region17
    $region16: #{veprecond_forward.1} parent=1 // pred_region
      _
    $region17: #{veprecond_forward.1} parent=1 // pred_fallthru
      _
    // Predicated region
    $region18: #{veprecond_forward.1} parent=1 // pred_check
      _
    $region19: #{veprecond_forward.1} parent=1 // pred_check_branch
      %40 = sbr.rel (0) target = $region21
    $region20: #{veprecond_forward.1} parent=1 // pred_region
      %41 = dma.done [#allocation4], 128
    $region21: #{veprecond_forward.1} parent=1 // pred_fallthru
      _
    // Predicated region
    $region22: #{veprecond_forward.1} parent=1 // pred_check
      _
    $region23: #{veprecond_forward.1} parent=1 // pred_check_branch
      %43 = sbr.rel (0) target = $region25
    $region24: #{veprecond_forward.1} parent=1 // pred_region
      %44 = dma.done [#allocation7], 4608
    $region25: #{veprecond_forward.1} parent=1 // pred_fallthru
      _
    %s45 = sld [smem:[#allocation2]]
    %v46 = vld [vmem:[#allocation3] sm:$0xff]
    %v47 = vld [vmem:[%s3] sm:$0xf]
    %v48 = vstv %s45
    %v49 = vmul.f32 %v48, 0.5
    %v50 = vlog2.pop %v49
    %v51 = vmul.f32 %v50, 0.6931472
    %v52 = vmul.f32 %v51, %v47
    %v54 = vrot.slane %v52, 7
    %v56 = vadd.f32 %v47, %v54
    %v57 = vld [vmem:[#allocation6] sm:$0xff]
    %v58 = vld [vmem:[#allocation6 + $0x8] sm:$0xff]
    %v59 = vlaneseq
    %v60 = vshrl.u32 %v59, 7
    %v61 = vsub.s32 1, %v60
    %v62 = vrot.slane %v56, %v61
    %vm63 = vcmask 130048
    %v65 = vsel %vm63, %v46, 0
    %67 = vmatprep.subr.mxu0 0.0
    %68 = vmatpush1.msra.mxu0 %v57
    %69 = vmatprep.subr.mxu0 0.0
    %70 = vmatpush1.msra.mxu0 %v58
    %71 = vmatprep.subr.mxu0 0.0
    %72 = vmatpush1.msra.mxu0 0.0
    %73 = vmatprep.subr.mxu0 0.0
    %74 = vmatpush1.msra.mxu0 0.0
    %75 = vmatprep.subr.mxu0 0.0
    %76 = vmatpush1.msra.mxu0 0.0
    %77 = vmatprep.subr.mxu0 0.0
    %78 = vmatpush1.msra.mxu0 0.0
    %79 = vmatprep.subr.mxu0 0.0
    %80 = vmatpush1.msra.mxu0 0.0
    %81 = vmatprep.subr.mxu0 0.0
    %82 = vmatpush1.msra.mxu0 0.0
    %83 = vmatprep.subr.mxu0 0.0
    %84 = vmatpush1.msra.mxu0 0.0
    %85 = vmatprep.subr.mxu0 0.0
    %86 = vmatpush1.msra.mxu0 0.0
    %87 = vmatprep.subr.mxu0 0.0
    %88 = vmatpush1.msra.mxu0 0.0
    %89 = vmatprep.subr.mxu0 0.0
    %90 = vmatpush1.msra.mxu0 0.0
    %91 = vmatprep.subr.mxu0 0.0
    %92 = vmatpush1.msra.mxu0 0.0
    %93 = vmatprep.subr.mxu0 0.0
    %94 = vmatpush1.msra.mxu0 0.0
    %95 = vmatprep.subr.mxu0 0.0
    %96 = vmatpush1.msra.mxu0 0.0
    %97 = vmatprep.subr.mxu0 0.0
    %98 = vmatpush1.msra.mxu0 0.0
    %99 = vmatprep.subr.mxu0 0.0
    %100 = vmatpush1.msra.mxu0 0.0
    %101 = vmatprep.subr.mxu0 0.0
    %102 = vmatpush1.msra.mxu0 0.0
    %103 = vmatprep.subr.mxu0 0.0
    %104 = vmatpush1.msra.mxu0 0.0
    %105 = vmatprep.subr.mxu0 0.0
    %106 = vmatpush1.msra.mxu0 0.0
    %107 = vmatprep.subr.mxu0 0.0
    %108 = vmatpush1.msra.mxu0 0.0
    %109 = vmatprep.subr.mxu0 0.0
    %110 = vmatpush1.msra.mxu0 0.0
    %111 = vmatprep.subr.mxu0 0.0
    %112 = vmatpush1.msra.mxu0 0.0
    %113 = vmatprep.subr.mxu0 0.0
    %114 = vmatpush1.msra.mxu0 0.0
    %115 = vmatprep.subr.mxu0 0.0
    %116 = vmatpush1.msra.mxu0 0.0
    %117 = vmatprep.subr.mxu0 0.0
    %118 = vmatpush1.msra.mxu0 0.0
    %119 = vmatprep.subr.mxu0 0.0
    %120 = vmatpush1.msra.mxu0 0.0
    %121 = vmatprep.subr.mxu0 0.0
    %122 = vmatpush1.msra.mxu0 0.0
    %123 = vmatprep.subr.mxu0 0.0
    %124 = vmatpush1.msra.mxu0 0.0
    %125 = vmatprep.subr.mxu0 0.0
    %126 = vmatpush1.msra.mxu0 0.0
    %127 = vmatprep.subr.mxu0 0.0
    %128 = vmatpush1.msra.mxu0 0.0
    %129 = vmatprep.subr.mxu0 0.0
    %130 = vmatpush1.msra.mxu0 0.0
    %131 = vmatprep.mubr.f32.mxu0 0.0
    %132 = vmatmul.mubr.f32.gmra.mrb[0].mxu0 %v65
    %v133 = vpop.f32.mrb[0].mxu0
    %v134 = vadd.f32 %v62, %v133
    %v135 = vpop.f32.mrb[0].mxu0
    %136 = vdwg.mxu0
    %v137 = vmax.f32 %v134, 0.0
    %v138 = vld [vmem:[#allocation6 + $0x20] sm:$0xff]
    %v139 = vld [vmem:[#allocation6 + $0x28] sm:$0xff]
    %v140 = vld [vmem:[#allocation6 + $0x30] sm:$0xff]
    %v141 = vld [vmem:[#allocation6 + $0x38] sm:$0xff]
    %v142 = vld [vmem:[#allocation6 + $0x40] sm:$0xff]
    %v143 = vld [vmem:[#allocation6 + $0x48] sm:$0xff]
    %v144 = vld [vmem:[#allocation6 + $0x50] sm:$0xff]
    %v145 = vld [vmem:[#allocation6 + $0x58] sm:$0xff]
    %v146 = vld [vmem:[#allocation6 + $0x60] sm:$0xff]
    %v147 = vld [vmem:[#allocation6 + $0x68] sm:$0xff]
    %v148 = vld [vmem:[#allocation6 + $0x70] sm:$0xff]
    %v149 = vld [vmem:[#allocation6 + $0x78] sm:$0xff]
    %v150 = vld [vmem:[#allocation6 + $0x80] sm:$0xff]
    %v151 = vld [vmem:[#allocation6 + $0x88] sm:$0xff]
    %v152 = vld [vmem:[#allocation6 + $0x90] sm:$0xff]
    %v153 = vld [vmem:[#allocation6 + $0x98] sm:$0xff]
    %v154 = vlaneseq
    %v155 = vshrl.u32 %v154, 7
    %v156 = vsub.s32 2, %v155
    %v157 = vrot.slane %v47, %v156
    %158 = vmatprep.subr.mxu0 0.0
    %159 = vmatpush1.msra.mxu0 %v138
    %160 = vmatprep.subr.mxu0 0.0
    %161 = vmatpush1.msra.mxu0 %v139
    %162 = vmatprep.subr.mxu0 0.0
    %163 = vmatpush1.msra.mxu0 %v140
    %164 = vmatprep.subr.mxu0 0.0
    %165 = vmatpush1.msra.mxu0 %v141
    %166 = vmatprep.subr.mxu0 0.0
    %167 = vmatpush1.msra.mxu0 %v142
    %168 = vmatprep.subr.mxu0 0.0
    %169 = vmatpush1.msra.mxu0 %v143
    %170 = vmatprep.subr.mxu0 0.0
    %171 = vmatpush1.msra.mxu0 %v144
    %172 = vmatprep.subr.mxu0 0.0
    %173 = vmatpush1.msra.mxu0 %v145
    %174 = vmatprep.subr.mxu0 0.0
    %175 = vmatpush1.msra.mxu0 %v146
    %176 = vmatprep.subr.mxu0 0.0
    %177 = vmatpush1.msra.mxu0 %v147
    %178 = vmatprep.subr.mxu0 0.0
    %179 = vmatpush1.msra.mxu0 %v148
    %180 = vmatprep.subr.mxu0 0.0
    %181 = vmatpush1.msra.mxu0 %v149
    %182 = vmatprep.subr.mxu0 0.0
    %183 = vmatpush1.msra.mxu0 %v150
    %184 = vmatprep.subr.mxu0 0.0
    %185 = vmatpush1.msra.mxu0 %v151
    %186 = vmatprep.subr.mxu0 0.0
    %187 = vmatpush1.msra.mxu0 %v152
    %188 = vmatprep.subr.mxu0 0.0
    %189 = vmatpush1.msra.mxu0 %v153
    %190 = vmatprep.subr.mxu0 0.0
    %191 = vmatpush1.msra.mxu0 0.0
    %192 = vmatprep.subr.mxu0 0.0
    %193 = vmatpush1.msra.mxu0 0.0
    %194 = vmatprep.subr.mxu0 0.0
    %195 = vmatpush1.msra.mxu0 0.0
    %196 = vmatprep.subr.mxu0 0.0
    %197 = vmatpush1.msra.mxu0 0.0
    %198 = vmatprep.subr.mxu0 0.0
    %199 = vmatpush1.msra.mxu0 0.0
    %200 = vmatprep.subr.mxu0 0.0
    %201 = vmatpush1.msra.mxu0 0.0
    %202 = vmatprep.subr.mxu0 0.0
    %203 = vmatpush1.msra.mxu0 0.0
    %204 = vmatprep.subr.mxu0 0.0
    %205 = vmatpush1.msra.mxu0 0.0
    %206 = vmatprep.subr.mxu0 0.0
    %207 = vmatpush1.msra.mxu0 0.0
    %208 = vmatprep.subr.mxu0 0.0
    %209 = vmatpush1.msra.mxu0 0.0
    %210 = vmatprep.subr.mxu0 0.0
    %211 = vmatpush1.msra.mxu0 0.0
    %212 = vmatprep.subr.mxu0 0.0
    %213 = vmatpush1.msra.mxu0 0.0
    %214 = vmatprep.subr.mxu0 0.0
    %215 = vmatpush1.msra.mxu0 0.0
    %216 = vmatprep.subr.mxu0 0.0
    %217 = vmatpush1.msra.mxu0 0.0
    %218 = vmatprep.subr.mxu0 0.0
    %219 = vmatpush1.msra.mxu0 0.0
    %220 = vmatprep.subr.mxu0 0.0
    %221 = vmatpush1.msra.mxu0 0.0
    %222 = vmatprep.mubr.f32.mxu0 0.0
    %223 = vmatmul.mubr.f32.gmra.mrb[0].mxu0 %v137
    %v224 = vpop.f32.mrb[0].mxu0
    %v225 = vadd.f32 %v157, %v224
    %v226 = vpop.f32.mrb[0].mxu0
    %227 = vdwg.mxu0
    %v228 = vmax.f32 %v225, 0.0
    %v229 = vld [vmem:[#allocation6 + $0xa0] sm:$0xff]
    %v230 = vld [vmem:[#allocation6 + $0xa8] sm:$0xff]
    %v231 = vld [vmem:[#allocation6 + $0xb0] sm:$0xff]
    %v232 = vld [vmem:[#allocation6 + $0xb8] sm:$0xff]
    %v233 = vld [vmem:[#allocation6 + $0xc0] sm:$0xff]
    %v234 = vld [vmem:[#allocation6 + $0xc8] sm:$0xff]
    %v235 = vld [vmem:[#allocation6 + $0xd0] sm:$0xff]
    %v236 = vld [vmem:[#allocation6 + $0xd8] sm:$0xff]
    %v237 = vld [vmem:[#allocation6 + $0xe0] sm:$0xff]
    %v238 = vld [vmem:[#allocation6 + $0xe8] sm:$0xff]
    %v239 = vld [vmem:[#allocation6 + $0xf0] sm:$0xff]
    %v240 = vld [vmem:[#allocation6 + $0xf8] sm:$0xff]
    %v241 = vld [vmem:[#allocation6 + $0x100] sm:$0xff]
    %v242 = vld [vmem:[#allocation6 + $0x108] sm:$0xff]
    %v243 = vld [vmem:[#allocation6 + $0x110] sm:$0xff]
    %v244 = vld [vmem:[#allocation6 + $0x118] sm:$0xff]
    %v245 = vlaneseq
    %v246 = vshrl.u32 %v245, 7
    %v247 = vsub.s32 3, %v246
    %v248 = vrot.slane %v47, %v247
    %249 = vmatprep.subr.mxu0 0.0
    %250 = vmatpush1.msra.mxu0 %v229
    %251 = vmatprep.subr.mxu0 0.0
    %252 = vmatpush1.msra.mxu0 %v230
    %253 = vmatprep.subr.mxu0 0.0
    %254 = vmatpush1.msra.mxu0 %v231
    %255 = vmatprep.subr.mxu0 0.0
    %256 = vmatpush1.msra.mxu0 %v232
    %257 = vmatprep.subr.mxu0 0.0
    %258 = vmatpush1.msra.mxu0 %v233
    %259 = vmatprep.subr.mxu0 0.0
    %260 = vmatpush1.msra.mxu0 %v234
    %261 = vmatprep.subr.mxu0 0.0
    %262 = vmatpush1.msra.mxu0 %v235
    %263 = vmatprep.subr.mxu0 0.0
    %264 = vmatpush1.msra.mxu0 %v236
    %265 = vmatprep.subr.mxu0 0.0
    %266 = vmatpush1.msra.mxu0 %v237
    %267 = vmatprep.subr.mxu0 0.0
    %268 = vmatpush1.msra.mxu0 %v238
    %269 = vmatprep.subr.mxu0 0.0
    %270 = vmatpush1.msra.mxu0 %v239
    %271 = vmatprep.subr.mxu0 0.0
    %272 = vmatpush1.msra.mxu0 %v240
    %273 = vmatprep.subr.mxu0 0.0
    %274 = vmatpush1.msra.mxu0 %v241
    %275 = vmatprep.subr.mxu0 0.0
    %276 = vmatpush1.msra.mxu0 %v242
    %277 = vmatprep.subr.mxu0 0.0
    %278 = vmatpush1.msra.mxu0 %v243
    %279 = vmatprep.subr.mxu0 0.0
    %280 = vmatpush1.msra.mxu0 %v244
    %281 = vmatprep.subr.mxu0 0.0
    %282 = vmatpush1.msra.mxu0 0.0
    %283 = vmatprep.subr.mxu0 0.0
    %284 = vmatpush1.msra.mxu0 0.0
    %285 = vmatprep.subr.mxu0 0.0
    %286 = vmatpush1.msra.mxu0 0.0
    %287 = vmatprep.subr.mxu0 0.0
    %288 = vmatpush1.msra.mxu0 0.0
    %289 = vmatprep.subr.mxu0 0.0
    %290 = vmatpush1.msra.mxu0 0.0
    %291 = vmatprep.subr.mxu0 0.0
    %292 = vmatpush1.msra.mxu0 0.0
    %293 = vmatprep.subr.mxu0 0.0
    %294 = vmatpush1.msra.mxu0 0.0
    %295 = vmatprep.subr.mxu0 0.0
    %296 = vmatpush1.msra.mxu0 0.0
    %297 = vmatprep.subr.mxu0 0.0
    %298 = vmatpush1.msra.mxu0 0.0
    %299 = vmatprep.subr.mxu0 0.0
    %300 = vmatpush1.msra.mxu0 0.0
    %301 = vmatprep.subr.mxu0 0.0
    %302 = vmatpush1.msra.mxu0 0.0
    %303 = vmatprep.subr.mxu0 0.0
    %304 = vmatpush1.msra.mxu0 0.0
    %305 = vmatprep.subr.mxu0 0.0
    %306 = vmatpush1.msra.mxu0 0.0
    %307 = vmatprep.subr.mxu0 0.0
    %308 = vmatpush1.msra.mxu0 0.0
    %309 = vmatprep.subr.mxu0 0.0
    %310 = vmatpush1.msra.mxu0 0.0
    %311 = vmatprep.subr.mxu0 0.0
    %312 = vmatpush1.msra.mxu0 0.0
    %313 = vmatprep.mubr.f32.mxu0 0.0
    %314 = vmatmul.mubr.f32.gmra.mrb[0].mxu0 %v228
    %v315 = vpop.f32.mrb[0].mxu0
    %v316 = vadd.f32 %v248, %v315
    %v317 = vpop.f32.mrb[0].mxu0
    %318 = vdwg.mxu0
    %v319 = vmax.f32 %v316, 0.0
    %v320 = vmul.f32 %v48, %v319
    %v321 = vadd.f32 %v46, %v320
    %322 = vst.msk [vmem:[#allocation8] sm:$0xff] %vm63, %v321
    // Predicated region
    $region26: #{veprecond_forward.1} parent=1 // pred_check
      _
    $region27: #{veprecond_forward.1} parent=1 // pred_check_branch
      %324 = sbr.rel (0) target = $region29
    $region28: #{veprecond_forward.1} parent=1 // pred_region
      %s326 = ssub.s32 128, 128
      %327 = vsyncadd [#allocation5], %s326
      %s329 = sshll.u32 [#allocation8], 4
      %s330 = int_to_ptr.vmem [resolvable:$true] %s329
      %332 = dma.vmem_to_hbm [thread:$0]  %s330, 128, %s4, [#allocation5]
    $region29: #{veprecond_forward.1} parent=1 // pred_fallthru
      _
    // Predicated region
    $region30: #{veprecond_forward.1} parent=1 // pred_check
      _
    $region31: #{veprecond_forward.1} parent=1 // pred_check_branch
      %334 = sbr.rel (0) target = $region33
    $region32: #{veprecond_forward.1} parent=1 // pred_region
      %335 = dma.done [#allocation5], 128
    $region33: #{veprecond_forward.1} parent=1 // pred_fallthru
      _
    %336 = vsyncpa [#allocation4], 1
    %337 = vsyncpa [#allocation7], 1
    %338 = vsyncpa [#allocation5], 1

</llo_original>
